<compile_context>
chip_gen: v7x
topology: tpu7x:2x2x1
jax: 0.10.0
libtpu: 0.0.40
codegen_flags: <defaults>
</compile_context>

<pallas_src>
import warnings

import jax
import jax.numpy as jnp
from jax.experimental import pallas as pl
from jax.experimental.pallas import tpu as pltpu


_LANE = 128
_MAX_BLOCK_COLS = 4096                 # widest lane tile (multiple of 128)
_WIDTH_CANDIDATES = (4096, 2048, 1024, 512, 256, 128)
_DESIRED_GRID_STEPS = 8                # >= 2-4 steps per TensorCore on v7x
_UNALIGNED_WIDTH_CAP = 2048            # trailing-dim collapse cap (unaligned n)


def _spike_kernel(x_ref, o_ref):
    # Heaviside forward: compare + cast.  ~2 VPU ops per vreg, fully hidden
    # under the HBM<->VMEM DMA; no further in-kernel tricks are warranted.
    o_ref[...] = (x_ref[...] > 0).astype(o_ref.dtype)


def _tuning_for_device():
    """Per-generation (target_block_bytes, vmem_limit_bytes or None)."""
    kind = ""
    try:
        kind = jax.devices()[0].device_kind.lower()
    except Exception:
        pass
    if "v7" in kind:
        # 64 MiB VMEM / TC: 4 MiB blocks -> 16 MiB double-buffered, 48 MiB limit.
        return 4 * 1024 * 1024, 48 * 1024 * 1024
    if "v6" in kind:
        # 128 MiB VMEM: 8 MiB blocks -> 32 MiB double-buffered, 64 MiB limit.
        return 8 * 1024 * 1024, 64 * 1024 * 1024
    # v5e / older / unknown: stay under the 16 MiB default scoped-VMEM limit.
    return 2 * 1024 * 1024, None


_TARGET_BLOCK_BYTES, _VMEM_LIMIT_BYTES = _tuning_for_device()


def _launch_2d(x2d, inplace):
    """Run the spike kernel over a 2D view with a (rows, cols) block grid."""
    rows, width = x2d.shape
    itemsize = jnp.dtype(x2d.dtype).itemsize
    min_sub = max(8, 32 // itemsize)   # sublane tile: 8 (f32), 16 (bf16), 32 (i8)

    # Column blocks: full width when modest, else 4096-lane tiles; any trailing
    # partial block is masked by Pallas (nothing is padded in HBM).
    bc = width if width <= _MAX_BLOCK_COLS else _MAX_BLOCK_COLS
    padded_bc = pl.cdiv(bc, _LANE) * _LANE      # VMEM lane footprint per block row
    col_steps = pl.cdiv(width, bc)

    # Row blocks: sized to the per-generation VMEM byte target, then capped so
    # the total grid has >= _DESIRED_GRID_STEPS steps when the array is large
    # enough (keeps both v7x TCs busy and the DMA pipeline overlapped).
    if rows <= min_sub:
        br = rows                                # single full-dim block
    else:
        br = _TARGET_BLOCK_BYTES // (padded_bc * itemsize)
        br = max(min_sub, (br // min_sub) * min_sub)
        want_row_steps = max(1, pl.cdiv(_DESIRED_GRID_STEPS, col_steps))
        cap = ((rows // want_row_steps) // min_sub) * min_sub
        br = min(br, cap) if cap >= min_sub else min(br, min_sub)
        br = min(br, rows)

    grid = (pl.cdiv(rows, br), col_steps)

    return pl.pallas_call(
        _spike_kernel,
        out_shape=jax.ShapeDtypeStruct((rows, width), x2d.dtype),
        grid_spec=pltpu.PrefetchScalarGridSpec(
            num_scalar_prefetch=0,
            grid=grid,
            in_specs=[pl.BlockSpec((br, bc), lambda i, j: (i, j))],
            out_specs=pl.BlockSpec((br, bc), lambda i, j: (i, j)),
        ),
        compiler_params=pltpu.CompilerParams(
            dimension_semantics=("parallel", "parallel"),
            vmem_limit_bytes=_VMEM_LIMIT_BYTES,
        ),
        input_output_aliases=({0: 0} if inplace else {}),
    )(x2d)


def _spike_forward(x, inplace=False):
    shape = x.shape
    n = int(x.size)

    if n < _LANE:
        # Empty / scalar / tiny inputs: kernel-launch overhead dominates.
        return (x > 0).astype(x.dtype)

    if n % _LANE == 0:
        # Lane-dense fast path: widest 128-multiple width that divides n.
        width = next(c for c in _WIDTH_CANDIDATES if n % c == 0)
    else:
        # Unaligned count: collapse trailing dims exactly (no pad, no slice);
        # the <128-lane remainder of each block is masked by Pallas.
        width = shape[-1]
        for d in reversed(shape[:-1]):
            if width * d <= _UNALIGNED_WIDTH_CAP or width < _LANE:
                width *= d
            else:
                break

    out2d = _launch_2d(x.reshape(n // width, width), inplace)
    return out2d.reshape(shape)


_spike_forward_jit = jax.jit(_spike_forward, static_argnames="inplace")
_spike_forward_donated = jax.jit(_spike_forward, static_argnames="inplace",
                                 donate_argnums=0)


def spike_function(x, dampening_factor: float = 0.3):
    """Forward of SpikeFunction: heaviside(x > 0), same shape/dtype as x.

    dampening_factor only scales the (unimplemented) surrogate gradient and has
    no effect on the forward values.
    """
    del dampening_factor  # forward pass is independent of the surrogate scale
    return _spike_forward_jit(x, inplace=False)


def spike_function_inplace(x, dampening_factor: float = 0.3):
    """Same forward, but x's HBM buffer is donated and reused for the output."""
    del dampening_factor
    return _spike_forward_donated(x, inplace=True)


if __name__ == "__main__":
    k1, k2, k3, k4 = jax.random.split(jax.random.PRNGKey(0), 4)

    def ref(t):
        return jnp.where(t > 0, jnp.ones_like(t), jnp.zeros_like(t))

    # Primary: small NCHW conv-style activation (aligned lane-dense path).
    x = jax.random.normal(k1, (2, 4, 16, 16), dtype=jnp.float32)
    z = jax.block_until_ready(spike_function(x, dampening_factor=0.3))
    assert z.shape == x.shape
    assert z.dtype == x.dtype
    assert bool(jnp.all(z == ref(x)))

    # Unaligned element count: native trailing-dim collapse, no pad / no slice.
    x2 = jax.random.normal(k2, (3, 5, 7, 11), dtype=jnp.float32)
    z2 = jax.block_until_ready(spike_function(x2))
    assert bool(jnp.all(z2 == ref(x2)))

    # Larger tensor: wide-lane multi-step grid path (>= 8 grid steps).
    x3 = jax.random.normal(k3, (4, 32, 64, 64), dtype=jnp.float32)
    z3 = jax.block_until_ready(spike_function(x3))
    assert bool(jnp.all(z3 == ref(x3)))

    # In-place variant: donated input, output aliases the input HBM buffer.
    x4 = jax.random.normal(k4, (2, 8, 32, 32), dtype=jnp.float32)
    z4_ref = ref(x4)                       # computed before x4 is donated
    with warnings.catch_warnings():
        warnings.simplefilter("ignore")    # tolerate "donated buffer" notices
        z4 = jax.block_until_ready(spike_function_inplace(x4))
    assert bool(jnp.all(z4 == z4_ref))

    # Tiny input exercises the XLA fallback (kernel not worth launching).
    x5 = jnp.array([[-1.0, 0.0, 2.0]], dtype=jnp.float32)
    assert bool(jnp.all(spike_function(x5) == ref(x5)))

    print("KERNEL_OK")
</pallas_src>

<mosaic_0001>
module attributes {stable_mosaic.version = 11 : i64} {
  func.func @_spike_kernel(%arg0: i32, %arg1: i32, %arg2: memref<1x2048xf32, #tpu.memory_space<vmem>>, %arg3: memref<1x2048xf32, #tpu.memory_space<vmem>>) attributes {dimension_semantics = [#tpu.dimension_semantics<parallel>, #tpu.dimension_semantics<parallel>], iteration_bounds = array<i64: 1, 1>, scalar_prefetch = 0 : i64, scratch_operands = 0 : i64, tpu.core_type = #tpu.core_type<tc>, window_params = [{transform_indices = @transform_0, window_bounds = array<i64: 1, 2048>}, {transform_indices = @transform_1, window_bounds = array<i64: 1, 2048>}]} {
    %c0 = arith.constant 0 : index
    %c0_0 = arith.constant 0 : index
    %0 = vector.load %arg2[%c0, %c0_0] : memref<1x2048xf32, #tpu.memory_space<vmem>>, vector<1x2048xf32>
    %cst = arith.constant 0.000000e+00 : f32
    %1 = vector.broadcast %cst : f32 to vector<1x2048xf32>
    %2 = arith.cmpf ogt, %0, %1 : vector<1x2048xf32>
    %3 = arith.extui %2 : vector<1x2048xi1> to vector<1x2048xi32>
    %4 = arith.sitofp %3 : vector<1x2048xi32> to vector<1x2048xf32>
    %c0_1 = arith.constant 0 : index
    %c0_2 = arith.constant 0 : index
    %5 = vector.load %arg3[%c0_1, %c0_2] : memref<1x2048xf32, #tpu.memory_space<vmem>>, vector<1x2048xf32>
    tpu.vector_store %arg3[%c0_1, %c0_2], %4 {strides = array<i32>} : memref<1x2048xf32, #tpu.memory_space<vmem>>, vector<1x2048xf32>,
    return
  }
  func.func @transform_0(%arg0: i32, %arg1: i32) -> (i32, i32) {
    %c0_i32 = arith.constant 0 : i32
    return %arg0, %arg1 : i32, i32
  }
  func.func @transform_1(%arg0: i32, %arg1: i32) -> (i32, i32) {
    %c0_i32 = arith.constant 0 : i32
    return %arg0, %arg1 : i32, i32
  }
}

</mosaic_0001>

<llo_original>
// kernel: _spike_forward.1
$region0: #{_spike_forward.1}
  #allocation0 [shape = 'u32[]', space=smem, size = 0x4, offset = 0x4, fixed_abs, tag = 'smem constant byte address 0x4 - core index']
  #allocation1 [shape = 'u32[144,128]{1,0:T(1,128)}', space=vmem, size = 0x12000, scoped, tag = 'internal scratch']
  %s0 = inlined_call_operand.vmem [shape: f32[1,2048], index: 0, kind: input, shape index: {}]
  %s1 = inlined_call_operand.vmem [shape: f32[1,2048], index: 1, kind: output, shape index: {}]
  %s2 = sld [smem:[#allocation0]]
  $region14: #{_spike_forward.1} parent=0
    _
  %s4 = ssub.s32 1, %s2
  %s5 = scalar_select 0, %s4, %s2
  // Predicated region
  $region2: #{_spike_forward.1} parent=0 // pred_check
    _
  $region3: #{_spike_forward.1} parent=0 // pred_check_branch
    %7 = sbr.rel (0) target = $region5
  $region4: #{_spike_forward.1} parent=0 // pred_region
    _
  $region5: #{_spike_forward.1} parent=0 // pred_fallthru
    _
  %v8 = vld [vmem:[%s0] sm:$0xff]
  %v9 = vld [vmem:[%s0 + $0x8] sm:$0xff]
  %vm10 = vcmp.gt.f32.partialorder %v8, 0.0
  %vm11 = vcmp.gt.f32.partialorder %v9, 0.0
  %v12 = vsel %vm10, 1, 0
  %v13 = vsel %vm11, 1, 0
  %v14 = vcvt.s32.f32 %v12
  %v15 = vcvt.s32.f32 %v13
  %16 = vst [vmem:[%s1] sm:$0xff] %v14
  %17 = vst [vmem:[%s1 + $0x8] sm:$0xff] %v15
  // Predicated region
  $region6: #{_spike_forward.1} parent=0 // pred_check
    _
  $region7: #{_spike_forward.1} parent=0 // pred_check_branch
    %19 = sbr.rel (0) target = $region9
  $region8: #{_spike_forward.1} parent=0 // pred_region
    _
  $region9: #{_spike_forward.1} parent=0 // pred_fallthru
    _
  // Predicated region
  $region10: #{_spike_forward.1} parent=0 // pred_check
    _
  $region11: #{_spike_forward.1} parent=0 // pred_check_branch
    %21 = sbr.rel (0) target = $region13
  $region12: #{_spike_forward.1} parent=0 // pred_region
    _
  $region13: #{_spike_forward.1} parent=0 // pred_fallthru
    _

</llo_original>
